<compile_context>
chip_gen: v5e
topology: v5e:2x2
jax: 0.10.0
libtpu: 0.0.40
codegen_flags: <defaults>
</compile_context>

<pallas_src>
import numpy as np
import jax
import jax.numpy as jnp
from jax.experimental import pallas as pl
from jax.experimental.pallas import tpu as pltpu

# ---- tree / problem sizes -------------------------------------------------
NUM_CLASSES = 8                       # dummy classes (complete binary induced tree)
NUM_INTERNAL = NUM_CLASSES - 1        # 7 internal decision nodes (heap 0..6)
DEPTH = 3                             # log2(NUM_CLASSES)
N_PAD = 128                           # lane-dense padding for weights / output

B, C_IN, H, W = 2, 4, 16, 16          # input image shape (NCHW)
D = C_IN * H * W                      # flattened feature dim (1024)


# ---- Pallas kernel ---------------------------------------------------------
def nbdt_kernel(x_ref, wd_ref, thr_ref, anc_ref, need_ref, out_ref):
    """Fused backbone + hard decision rules + tree traversal + one-hot output.

    x_ref   : (TILE_B, D)      input rows (f32 or bf16)
    wd_ref  : (D, N_PAD)       folded decision weight, lanes 0..6 = w1 @ (w_right-w_left)
    thr_ref : (1, N_PAD)       decision thresholds = -(b1 @ (w_right - w_left))
    anc_ref : (N_PAD, N_PAD)   signed ancestor matrix (+1 right-anc, -1 left-anc, 0 else)
    need_ref: (1, N_PAD)       per-class right-ancestor count (unreachable for pad lanes)
    out_ref : (TILE_B, N_PAD)  one-hot logits in lanes 0..NUM_CLASSES-1, zeros elsewhere
    """
    # MXU matmul #1: per-node decision margin (right - left child logit),
    # folded through the backbone.  margins[:, k] for node k in lanes 0..6.
    margins = jnp.dot(x_ref[...], wd_ref[...],
                      preferred_element_type=jnp.float32)          # (tb, 128)

    # Hard decision per node: right child wins iff margin > thr (ties -> left,
    # matching torch.max first-occurrence argmax on the unfused logits).
    preds = (margins > thr_ref[...]).astype(jnp.float32)           # (tb, 128)

    # MXU matmul #2 (replaces the old VPU/XLU lane-splat tree walk):
    # score[:, c] = sum_k preds[:, k] * anc[k, c].  The max achievable value for
    # class c is need[c] (its number of right-ancestors) and it is reached iff
    # every decision on c's root->leaf path matches -> exactly one class hits it.
    score = jnp.dot(preds, anc_ref[...],
                    preferred_element_type=jnp.float32)            # (tb, 128)

    # predicted_to_logits(pred) == I[pred]: exact small-integer equality in f32.
    out_ref[...] = (score == need_ref[...]).astype(out_ref.dtype)


# ---- tree construction -----------------------------------------------------
def build_tree_matrices():
    """Deterministic induced hierarchy: complete binary tree over NUM_CLASSES leaves.

    Returns per-node mean-weight matrices (C, NUM_INTERNAL) for the left and right
    children (EmbeddedDecisionRules.get_node_logits expressed as a matmul).
    """
    def subtree_leaves(heap_idx):
        if heap_idx >= NUM_INTERNAL:          # leaf
            return [heap_idx - NUM_INTERNAL]
        return subtree_leaves(2 * heap_idx + 1) + subtree_leaves(2 * heap_idx + 2)

    w_left = np.zeros((NUM_CLASSES, NUM_INTERNAL), np.float32)
    w_right = np.zeros((NUM_CLASSES, NUM_INTERNAL), np.float32)
    for i in range(NUM_INTERNAL):
        for child, mat in ((2 * i + 1, w_left), (2 * i + 2, w_right)):
            leaves = subtree_leaves(child)
            mat[leaves, i] = 1.0 / len(leaves)   # mean over the child's leaf classes
    return jnp.asarray(w_left), jnp.asarray(w_right)


def build_ancestor_tables():
    """Signed ancestor matrix + per-class right-ancestor count, padded to 128 lanes."""
    anc = np.zeros((N_PAD, N_PAD), np.float32)
    need = np.full((1, N_PAD), 1e6, np.float32)   # unreachable for padded lanes
    for c in range(NUM_CLASSES):
        node, n_right = 0, 0
        for level in range(DEPTH):
            bit = (c >> (DEPTH - 1 - level)) & 1          # 1 -> right child
            anc[node, c] = 1.0 if bit == 1 else -1.0
            n_right += bit
            node = 2 * node + 1 + bit
        need[0, c] = float(n_right)
    return jnp.asarray(anc), jnp.asarray(need)


# ---- plain-JAX glue / wrapper ---------------------------------------------
def fold_params(w1, b1, w_left, w_right, use_bf16=False):
    """Fold backbone + decision-rule matmuls into one lane-dense weight + tables."""
    d = w1.shape[0]
    w_delta = w_right - w_left                               # (C, 7)
    w_diff = w1 @ w_delta                                    # (D, 7)
    thr = -(b1 @ w_delta)                                    # (1, 7)
    in_dtype = jnp.bfloat16 if use_bf16 else jnp.float32
    wd_pad = (jnp.zeros((d, N_PAD), jnp.float32)
              .at[:, :NUM_INTERNAL].set(w_diff).astype(in_dtype))
    thr_pad = jnp.zeros((1, N_PAD), jnp.float32).at[:, :NUM_INTERNAL].set(thr)
    anc, need = build_ancestor_tables()
    return dict(wd=wd_pad, thr=thr_pad, anc=anc, need=need, in_dtype=in_dtype)


def _pick_tile_b(bsz):
    if bsz >= 512:
        return 256   # v6e/v7x MXU height; >=2 parallel grid steps -> both v7x TCs
    if bsz >= 256:
        return 128   # full v5e MXU height; still >=2 grid steps on v7x
    return 16        # tiny / toy batches: avoid padding 2 -> 128+


def nbdt_forward(x_nchw, params, tile_b=None):
    wd, thr, anc, need = params["wd"], params["thr"], params["anc"], params["need"]
    bsz = x_nchw.shape[0]
    d = wd.shape[0]
    x_flat = x_nchw.reshape(bsz, -1).astype(params["in_dtype"])   # (B, D)

    tile = _pick_tile_b(bsz) if tile_b is None else tile_b
    b_pad = ((bsz + tile - 1) // tile) * tile
    if b_pad != bsz:
        x_flat = jnp.pad(x_flat, ((0, b_pad - bsz), (0, 0)))

    out = pl.pallas_call(
        nbdt_kernel,
        out_shape=jax.ShapeDtypeStruct((b_pad, N_PAD), jnp.float32),
        grid=(b_pad // tile,),
        in_specs=[
            pl.BlockSpec((tile, d), lambda i: (i, 0)),        # x rows (gridded)
            pl.BlockSpec((d, N_PAD), lambda i: (0, 0)),       # folded weight (pinned)
            pl.BlockSpec((1, N_PAD), lambda i: (0, 0)),       # thresholds    (pinned)
            pl.BlockSpec((N_PAD, N_PAD), lambda i: (0, 0)),   # ancestor mat  (pinned)
            pl.BlockSpec((1, N_PAD), lambda i: (0, 0)),       # needed counts (pinned)
        ],
        out_specs=pl.BlockSpec((tile, N_PAD), lambda i: (i, 0)),
        compiler_params=pltpu.CompilerParams(
            dimension_semantics=("parallel",)),
    )(x_flat, wd, thr, anc, need)

    return out[:bsz, :NUM_CLASSES]


def nbdt_reference(x_nchw, w1, b1, w_left, w_right):
    """Pure-JAX reference of the original (unfused) NBDT semantics."""
    bsz = x_nchw.shape[0]
    x_flat = x_nchw.reshape(bsz, -1).astype(jnp.float32)
    logits = x_flat @ w1 + b1                                   # (B, C)
    left = logits @ w_left                                      # (B, 7)
    right = logits @ w_right                                    # (B, 7)
    preds = (right > left).astype(jnp.int32)                    # (B, 7), ties -> left
    node = jnp.zeros((bsz,), jnp.int32)
    rows = jnp.arange(bsz)
    for _ in range(DEPTH):                                      # greedy root->leaf walk
        node = 2 * node + 1 + preds[rows, node]
    cls = node - NUM_INTERNAL
    return jax.nn.one_hot(cls, NUM_CLASSES, dtype=jnp.float32)


if __name__ == "__main__":
    key = jax.random.PRNGKey(0)
    kx, kw, kb, kx2 = jax.random.split(key, 4)

    # deterministic synthetic backbone parameters (flatten + linear classifier)
    # TODO(synk): the real NBDT backbone is an arbitrary nn.Module (e.g. ResNet18);
    # a conv backbone is out of scope here and is stood in by flatten + linear.
    x = jax.random.normal(kx, (B, C_IN, H, W), dtype=jnp.float32)
    w1 = jax.random.normal(kw, (D, NUM_CLASSES), dtype=jnp.float32) * 0.05
    b1 = jax.random.normal(kb, (1, NUM_CLASSES), dtype=jnp.float32) * 0.01

    w_left, w_right = build_tree_matrices()

    # --- f32 exact-parity run (B=2 toy batch, 16-row tile) -------------------
    params_f32 = fold_params(w1, b1, w_left, w_right, use_bf16=False)
    out = jax.block_until_ready(nbdt_forward(x, params_f32))
    ref = nbdt_reference(x, w1, b1, w_left, w_right)
    np.testing.assert_allclose(np.asarray(out), np.asarray(ref), atol=1e-5)
    assert np.allclose(np.asarray(out).sum(axis=-1), 1.0)

    # --- larger-batch run exercising the 128-row tile / multi-step grid ------
    x_big = jax.random.normal(kx2, (384, C_IN, H, W), dtype=jnp.float32)
    out_big = jax.block_until_ready(nbdt_forward(x_big, params_f32))
    ref_big = nbdt_reference(x_big, w1, b1, w_left, w_right)
    np.testing.assert_allclose(np.asarray(out_big), np.asarray(ref_big), atol=1e-5)

    # --- bf16-input run (halves DMA); validity check only (hard decisions can
    #     legitimately differ from f32 at near-zero margins) --------------------
    params_bf16 = fold_params(w1, b1, w_left, w_right, use_bf16=True)
    out_bf = np.asarray(jax.block_until_ready(nbdt_forward(x, params_bf16)))
    assert np.allclose(out_bf.sum(axis=-1), 1.0)
    assert np.all((out_bf == 0.0) | (out_bf == 1.0))

    print("KERNEL_OK")
</pallas_src>

<mosaic_0001>
module attributes {stable_mosaic.version = 11 : i64} {
  func.func @nbdt_kernel(%arg0: i32, %arg1: memref<16x1024xf32, #tpu.memory_space<vmem>>, %arg2: memref<1024x128xf32, #tpu.memory_space<vmem>>, %arg3: memref<1x128xf32, #tpu.memory_space<vmem>>, %arg4: memref<128x128xf32, #tpu.memory_space<vmem>>, %arg5: memref<1x128xf32, #tpu.memory_space<vmem>>, %arg6: memref<16x128xf32, #tpu.memory_space<vmem>>) attributes {dimension_semantics = [#tpu.dimension_semantics<parallel>], iteration_bounds = array<i64: 1>, scalar_prefetch = 0 : i64, scratch_operands = 0 : i64, tpu.core_type = #tpu.core_type<tc>, window_params = [{transform_indices = @transform_0, window_bounds = array<i64: 16, 1024>}, {pipeline_mode = #tpu.pipeline_mode<synchronous>, transform_indices = @transform_1, window_bounds = array<i64: 1024, 128>}, {pipeline_mode = #tpu.pipeline_mode<synchronous>, transform_indices = @transform_2, window_bounds = array<i64: 1, 128>}, {pipeline_mode = #tpu.pipeline_mode<synchronous>, transform_indices = @transform_3, window_bounds = array<i64: 128, 128>}, {pipeline_mode = #tpu.pipeline_mode<synchronous>, transform_indices = @transform_4, window_bounds = array<i64: 1, 128>}, {transform_indices = @transform_5, window_bounds = array<i64: 16, 128>}]} {
    %c0 = arith.constant 0 : index
    %c0_0 = arith.constant 0 : index
    %0 = vector.load %arg1[%c0, %c0_0] : memref<16x1024xf32, #tpu.memory_space<vmem>>, vector<16x1024xf32>
    %c0_1 = arith.constant 0 : index
    %c0_2 = arith.constant 0 : index
    %1 = vector.load %arg2[%c0_1, %c0_2] : memref<1024x128xf32, #tpu.memory_space<vmem>>, vector<1024x128xf32>
    %cst = arith.constant dense<0.000000e+00> : vector<16x128xf32>
    %2 = tpu.matmul %0, %1, %cst {dimension_numbers = #tpu.dot_dimension_numbers<[1], [0], [0], [1], [0, 0, 1, 1], [], []>} : vector<16x1024xf32>, vector<1024x128xf32>, vector<16x128xf32> -> vector<16x128xf32>
    %c0_3 = arith.constant 0 : index
    %c0_4 = arith.constant 0 : index
    %3 = vector.load %arg3[%c0_3, %c0_4] : memref<1x128xf32, #tpu.memory_space<vmem>>, vector<1x128xf32>
    %4 = vector.broadcast %3 : vector<1x128xf32> to vector<16x128xf32>
    %5 = arith.cmpf ogt, %2, %4 : vector<16x128xf32>
    %6 = arith.extui %5 : vector<16x128xi1> to vector<16x128xi32>
    %7 = arith.sitofp %6 : vector<16x128xi32> to vector<16x128xf32>
    %c0_5 = arith.constant 0 : index
    %c0_6 = arith.constant 0 : index
    %8 = vector.load %arg4[%c0_5, %c0_6] : memref<128x128xf32, #tpu.memory_space<vmem>>, vector<128x128xf32>
    %cst_7 = arith.constant dense<0.000000e+00> : vector<16x128xf32>
    %9 = tpu.matmul %7, %8, %cst_7 {dimension_numbers = #tpu.dot_dimension_numbers<[1], [0], [0], [1], [0, 0, 1, 1], [], []>} : vector<16x128xf32>, vector<128x128xf32>, vector<16x128xf32> -> vector<16x128xf32>
    %c0_8 = arith.constant 0 : index
    %c0_9 = arith.constant 0 : index
    %10 = vector.load %arg5[%c0_8, %c0_9] : memref<1x128xf32, #tpu.memory_space<vmem>>, vector<1x128xf32>
    %11 = vector.broadcast %10 : vector<1x128xf32> to vector<16x128xf32>
    %12 = arith.cmpf oeq, %9, %11 : vector<16x128xf32>
    %13 = arith.extui %12 : vector<16x128xi1> to vector<16x128xi32>
    %14 = arith.sitofp %13 : vector<16x128xi32> to vector<16x128xf32>
    %c0_10 = arith.constant 0 : index
    %c0_11 = arith.constant 0 : index
    %15 = vector.load %arg6[%c0_10, %c0_11] : memref<16x128xf32, #tpu.memory_space<vmem>>, vector<16x128xf32>
    tpu.vector_store %arg6[%c0_10, %c0_11], %14 {strides = array<i32>} : memref<16x128xf32, #tpu.memory_space<vmem>>, vector<16x128xf32>,
    return
  }
  func.func @transform_0(%arg0: i32) -> (i32, i32) {
    %c0_i32 = arith.constant 0 : i32
    %c0_i32_0 = arith.constant 0 : i32
    return %arg0, %c0_i32 : i32, i32
  }
  func.func @transform_1(%arg0: i32) -> (i32, i32) {
    %c0_i32 = arith.constant 0 : i32
    %c0_i32_0 = arith.constant 0 : i32
    %c0_i32_1 = arith.constant 0 : i32
    return %c0_i32, %c0_i32_0 : i32, i32
  }
  func.func @transform_2(%arg0: i32) -> (i32, i32) {
    %c0_i32 = arith.constant 0 : i32
    %c0_i32_0 = arith.constant 0 : i32
    %c0_i32_1 = arith.constant 0 : i32
    return %c0_i32, %c0_i32_0 : i32, i32
  }
  func.func @transform_3(%arg0: i32) -> (i32, i32) {
    %c0_i32 = arith.constant 0 : i32
    %c0_i32_0 = arith.constant 0 : i32
    %c0_i32_1 = arith.constant 0 : i32
    return %c0_i32, %c0_i32_0 : i32, i32
  }
  func.func @transform_4(%arg0: i32) -> (i32, i32) {
    %c0_i32 = arith.constant 0 : i32
    %c0_i32_0 = arith.constant 0 : i32
    %c0_i32_1 = arith.constant 0 : i32
    return %c0_i32, %c0_i32_0 : i32, i32
  }
  func.func @transform_5(%arg0: i32) -> (i32, i32) {
    %c0_i32 = arith.constant 0 : i32
    %c0_i32_0 = arith.constant 0 : i32
    return %arg0, %c0_i32 : i32, i32
  }
}

</mosaic_0001>

<llo_original>
// kernel: tpu_custom_call.1
$region0: #{tpu_custom_call.1}
  #allocation0 [shape = 'u32[]', space=smem, size = 0x4, offset = 0x4, fixed_abs, tag = 'smem constant byte address 0x4 - core index']
  #allocation1 [shape = 'u32[72,128]{1,0:T(1,128)}', space=vmem, size = 0x9000, scoped, tag = 'internal scratch']
  %s0 = inlined_call_operand.hbm [shape: f32[16,1024], index: 0, kind: input, shape index: {}]
  %s1 = inlined_call_operand.hbm [shape: f32[1024,128], index: 1, kind: input, shape index: {}]
  %s2 = inlined_call_operand.vmem [shape: f32[1,128], index: 2, kind: input, shape index: {}]
  %s3 = inlined_call_operand.hbm [shape: f32[128,128], index: 3, kind: input, shape index: {}]
  %s4 = inlined_call_operand.vmem [shape: f32[1,128], index: 4, kind: input, shape index: {}]
  %s5 = inlined_call_operand.hbm [shape: f32[16,128], index: 5, kind: output, shape index: {}]
  %s6 = sld [smem:[#allocation0]]
  $region42: #{tpu_custom_call.1} parent=0
    _
  %s8 = ssub.s32 1, %s6
  %s9 = scalar_select 0, %s8, %s6
  $region1: #{tpu_custom_call.1} parent=0
    #allocation2 [shape = 'u8[65536]{0}', space=vmem, size = 0x10000, scoped, tag = 'input window, operand 0, single buffered']
    #allocation3 [shape = 's32[1]{0}', space=sflag, size = 0x4, scoped, tag = 'scoped memory for tpu_custom_call.1']
    #allocation4 [shape = 's32[1]{0}', space=sflag, size = 0x4, scoped, tag = 'scoped memory for tpu_custom_call.1']
    #allocation5 [shape = 'u8[524288]{0}', space=vmem, size = 0x80000, scoped, tag = 'input window, operand 1, single buffered']
    #allocation6 [shape = 's32[1]{0}', space=sflag, size = 0x4, scoped, tag = 'scoped memory for tpu_custom_call.1']
    #allocation7 [shape = 'u8[65536]{0}', space=vmem, size = 0x10000, scoped, tag = 'input window, operand 3, single buffered']
    #allocation8 [shape = 'u8[8192]{0}', space=vmem, size = 0x2000, scoped, tag = 'output window, operand 0, single buffered']
    %10 = vsyncpa [#allocation3], 0
    %11 = vsyncpa [#allocation6], 0
    %12 = vsyncpa [#allocation4], 0
    // Predicated region
    $region2: #{tpu_custom_call.1} parent=1 // pred_check
      _
    $region3: #{tpu_custom_call.1} parent=1 // pred_check_branch
      %14 = sbr.rel (0) target = $region5
    $region4: #{tpu_custom_call.1} parent=1 // pred_region
      %16 = vsyncadd [#allocation3], 0
      %s17 = sshll.u32 %s0, 4
      %s18 = int_to_ptr.hbm [resolvable:$true] %s17
      %s19 = sshll.u32 [#allocation2], 4
      %s20 = int_to_ptr.vmem [resolvable:$true] %s19
      %25 = dma.hbm_to_vmem [thread:$0]  %s18, 2048, %s20, [#allocation3], 1024, 1024, 64
    $region5: #{tpu_custom_call.1} parent=1 // pred_fallthru
      _
    // Predicated region
    $region6: #{tpu_custom_call.1} parent=1 // pred_check
      _
    $region7: #{tpu_custom_call.1} parent=1 // pred_check_branch
      %27 = sbr.rel (0) target = $region9
    $region8: #{tpu_custom_call.1} parent=1 // pred_region
      %29 = vsyncadd [#allocation6], 0
      %s30 = sshll.u32 %s1, 4
      %s31 = int_to_ptr.hbm [resolvable:$true] %s30
      %s32 = sshll.u32 [#allocation5], 4
      %s33 = int_to_ptr.vmem [resolvable:$true] %s32
      %38 = dma.hbm_to_vmem [thread:$0]  %s31, 16384, %s33, [#allocation6], 128, 128, 8
    $region9: #{tpu_custom_call.1} parent=1 // pred_fallthru
      _
    // Predicated region
    $region10: #{tpu_custom_call.1} parent=1 // pred_check
      _
    $region11: #{tpu_custom_call.1} parent=1 // pred_check_branch
      %40 = sbr.rel (0) target = $region13
    $region12: #{tpu_custom_call.1} parent=1 // pred_region
      _
    $region13: #{tpu_custom_call.1} parent=1 // pred_fallthru
      _
    // Predicated region
    $region14: #{tpu_custom_call.1} parent=1 // pred_check
      _
    $region15: #{tpu_custom_call.1} parent=1 // pred_check_branch
      %42 = sbr.rel (0) target = $region17
    $region16: #{tpu_custom_call.1} parent=1 // pred_region
      %44 = vsyncadd [#allocation6], 0
      %s45 = sshll.u32 %s3, 4
      %s46 = int_to_ptr.hbm [resolvable:$true] %s45
      %s47 = sshll.u32 [#allocation7], 4
      %s48 = int_to_ptr.vmem [resolvable:$true] %s47
      %53 = dma.hbm_to_vmem [thread:$0]  %s46, 2048, %s48, [#allocation6], 128, 128, 8
    $region17: #{tpu_custom_call.1} parent=1 // pred_fallthru
      _
    // Predicated region
    $region18: #{tpu_custom_call.1} parent=1 // pred_check
      _
    $region19: #{tpu_custom_call.1} parent=1 // pred_check_branch
      %55 = sbr.rel (0) target = $region21
    $region20: #{tpu_custom_call.1} parent=1 // pred_region
      _
    $region21: #{tpu_custom_call.1} parent=1 // pred_fallthru
      _
    // Predicated region
    $region22: #{tpu_custom_call.1} parent=1 // pred_check
      _
    $region23: #{tpu_custom_call.1} parent=1 // pred_check_branch
      %57 = sbr.rel (0) target = $region25
    $region24: #{tpu_custom_call.1} parent=1 // pred_region
      %59 = dma.done [#allocation3], 2048
    $region25: #{tpu_custom_call.1} parent=1 // pred_fallthru
      _
    // Predicated region
    $region26: #{tpu_custom_call.1} parent=1 // pred_check
      _
    $region27: #{tpu_custom_call.1} parent=1 // pred_check_branch
      %61 = sbr.rel (0) target = $region29
    $region28: #{tpu_custom_call.1} parent=1 // pred_region
      %63 = dma.done [#allocation6], 16384
    $region29: #{tpu_custom_call.1} parent=1 // pred_fallthru
      _
    // Predicated region
    $region30: #{tpu_custom_call.1} parent=1 // pred_check
      _
    $region31: #{tpu_custom_call.1} parent=1 // pred_check_branch
      %65 = sbr.rel (0) target = $region33
    $region32: #{tpu_custom_call.1} parent=1 // pred_region
      %67 = dma.done [#allocation6], 2048
    $region33: #{tpu_custom_call.1} parent=1 // pred_fallthru
      _
    %v68 = vld [vmem:[#allocation2] sm:$0xff]
    %v69 = vld [vmem:[#allocation2 + $0x8] sm:$0xff]
    %v70 = vld [vmem:[#allocation2 + $0x10] sm:$0xff]
    %v71 = vld [vmem:[#allocation2 + $0x18] sm:$0xff]
    %v72 = vld [vmem:[#allocation2 + $0x20] sm:$0xff]
    %v73 = vld [vmem:[#allocation2 + $0x28] sm:$0xff]
    %v74 = vld [vmem:[#allocation2 + $0x30] sm:$0xff]
    %v75 = vld [vmem:[#allocation2 + $0x38] sm:$0xff]
    %v76 = vld [vmem:[#allocation2 + $0x40] sm:$0xff]
    %v77 = vld [vmem:[#allocation2 + $0x48] sm:$0xff]
    %v78 = vld [vmem:[#allocation2 + $0x50] sm:$0xff]
    %v79 = vld [vmem:[#allocation2 + $0x58] sm:$0xff]
    %v80 = vld [vmem:[#allocation2 + $0x60] sm:$0xff]
    %v81 = vld [vmem:[#allocation2 + $0x68] sm:$0xff]
    %v82 = vld [vmem:[#allocation2 + $0x70] sm:$0xff]
    %v83 = vld [vmem:[#allocation2 + $0x78] sm:$0xff]
    %v84 = vld [vmem:[#allocation5] sm:$0xff]
    %v85 = vld [vmem:[#allocation5 + $0x8] sm:$0xff]
    %v86 = vld [vmem:[#allocation5 + $0x10] sm:$0xff]
    %v87 = vld [vmem:[#allocation5 + $0x18] sm:$0xff]
    %v88 = vld [vmem:[#allocation5 + $0x20] sm:$0xff]
    %v89 = vld [vmem:[#allocation5 + $0x28] sm:$0xff]
    %v90 = vld [vmem:[#allocation5 + $0x30] sm:$0xff]
    %v91 = vld [vmem:[#allocation5 + $0x38] sm:$0xff]
    %v92 = vld [vmem:[#allocation5 + $0x40] sm:$0xff]
    %v93 = vld [vmem:[#allocation5 + $0x48] sm:$0xff]
    %v94 = vld [vmem:[#allocation5 + $0x50] sm:$0xff]
    %v95 = vld [vmem:[#allocation5 + $0x58] sm:$0xff]
    %v96 = vld [vmem:[#allocation5 + $0x60] sm:$0xff]
    %v97 = vld [vmem:[#allocation5 + $0x68] sm:$0xff]
    %v98 = vld [vmem:[#allocation5 + $0x70] sm:$0xff]
    %v99 = vld [vmem:[#allocation5 + $0x78] sm:$0xff]
    %v100 = vld [vmem:[#allocation5 + $0x80] sm:$0xff]
    %v101 = vld [vmem:[#allocation5 + $0x88] sm:$0xff]
    %v102 = vld [vmem:[#allocation5 + $0x90] sm:$0xff]
    %v103 = vld [vmem:[#allocation5 + $0x98] sm:$0xff]
    %v104 = vld [vmem:[#allocation5 + $0xa0] sm:$0xff]
    %v105 = vld [vmem:[#allocation5 + $0xa8] sm:$0xff]
    %v106 = vld [vmem:[#allocation5 + $0xb0] sm:$0xff]
    %v107 = vld [vmem:[#allocation5 + $0xb8] sm:$0xff]
    %v108 = vld [vmem:[#allocation5 + $0xc0] sm:$0xff]
    %v109 = vld [vmem:[#allocation5 + $0xc8] sm:$0xff]
    %v110 = vld [vmem:[#allocation5 + $0xd0] sm:$0xff]
    %v111 = vld [vmem:[#allocation5 + $0xd8] sm:$0xff]
    %v112 = vld [vmem:[#allocation5 + $0xe0] sm:$0xff]
    %v113 = vld [vmem:[#allocation5 + $0xe8] sm:$0xff]
    %v114 = vld [vmem:[#allocation5 + $0xf0] sm:$0xff]
    %v115 = vld [vmem:[#allocation5 + $0xf8] sm:$0xff]
    %v116 = vld [vmem:[#allocation5 + $0x100] sm:$0xff]
    %v117 = vld [vmem:[#allocation5 + $0x108] sm:$0xff]
    %v118 = vld [vmem:[#allocation5 + $0x110] sm:$0xff]
    %v119 = vld [vmem:[#allocation5 + $0x118] sm:$0xff]
    %v120 = vld [vmem:[#allocation5 + $0x120] sm:$0xff]
    %v121 = vld [vmem:[#allocation5 + $0x128] sm:$0xff]
    %v122 = vld [vmem:[#allocation5 + $0x130] sm:$0xff]
    %v123 = vld [vmem:[#allocation5 + $0x138] sm:$0xff]
    %v124 = vld [vmem:[#allocation5 + $0x140] sm:$0xff]
    %v125 = vld [vmem:[#allocation5 + $0x148] sm:$0xff]
    %v126 = vld [vmem:[#allocation5 + $0x150] sm:$0xff]
    %v127 = vld [vmem:[#allocation5 + $0x158] sm:$0xff]
    %v128 = vld [vmem:[#allocation5 + $0x160] sm:$0xff]
    %v129 = vld [vmem:[#allocation5 + $0x168] sm:$0xff]
    %v130 = vld [vmem:[#allocation5 + $0x170] sm:$0xff]
    %v131 = vld [vmem:[#allocation5 + $0x178] sm:$0xff]
    %v132 = vld [vmem:[#allocation5 + $0x180] sm:$0xff]
    %v133 = vld [vmem:[#allocation5 + $0x188] sm:$0xff]
    %v134 = vld [vmem:[#allocation5 + $0x190] sm:$0xff]
    %v135 = vld [vmem:[#allocation5 + $0x198] sm:$0xff]
    %v136 = vld [vmem:[#allocation5 + $0x1a0] sm:$0xff]
    %v137 = vld [vmem:[#allocation5 + $0x1a8] sm:$0xff]
    %v138 = vld [vmem:[#allocation5 + $0x1b0] sm:$0xff]
    %v139 = vld [vmem:[#allocation5 + $0x1b8] sm:$0xff]
    %v140 = vld [vmem:[#allocation5 + $0x1c0] sm:$0xff]
    %v141 = vld [vmem:[#allocation5 + $0x1c8] sm:$0xff]
    %v142 = vld [vmem:[#allocation5 + $0x1d0] sm:$0xff]
    %v143 = vld [vmem:[#allocation5 + $0x1d8] sm:$0xff]
    %v144 = vld [vmem:[#allocation5 + $0x1e0] sm:$0xff]
    %v145 = vld [vmem:[#allocation5 + $0x1e8] sm:$0xff]
    %v146 = vld [vmem:[#allocation5 + $0x1f0] sm:$0xff]
    %v147 = vld [vmem:[#allocation5 + $0x1f8] sm:$0xff]
    %v148 = vld [vmem:[#allocation5 + $0x200] sm:$0xff]
    %v149 = vld [vmem:[#allocation5 + $0x208] sm:$0xff]
    %v150 = vld [vmem:[#allocation5 + $0x210] sm:$0xff]
    %v151 = vld [vmem:[#allocation5 + $0x218] sm:$0xff]
    %v152 = vld [vmem:[#allocation5 + $0x220] sm:$0xff]
    %v153 = vld [vmem:[#allocation5 + $0x228] sm:$0xff]
    %v154 = vld [vmem:[#allocation5 + $0x230] sm:$0xff]
    %v155 = vld [vmem:[#allocation5 + $0x238] sm:$0xff]
    %v156 = vld [vmem:[#allocation5 + $0x240] sm:$0xff]
    %v157 = vld [vmem:[#allocation5 + $0x248] sm:$0xff]
    %v158 = vld [vmem:[#allocation5 + $0x250] sm:$0xff]
    %v159 = vld [vmem:[#allocation5 + $0x258] sm:$0xff]
    %v160 = vld [vmem:[#allocation5 + $0x260] sm:$0xff]
    %v161 = vld [vmem:[#allocation5 + $0x268] sm:$0xff]
    %v162 = vld [vmem:[#allocation5 + $0x270] sm:$0xff]
    %v163 = vld [vmem:[#allocation5 + $0x278] sm:$0xff]
    %v164 = vld [vmem:[#allocation5 + $0x280] sm:$0xff]
    %v165 = vld [vmem:[#allocation5 + $0x288] sm:$0xff]
    %v166 = vld [vmem:[#allocation5 + $0x290] sm:$0xff]
    %v167 = vld [vmem:[#allocation5 + $0x298] sm:$0xff]
    %v168 = vld [vmem:[#allocation5 + $0x2a0] sm:$0xff]
    %v169 = vld [vmem:[#allocation5 + $0x2a8] sm:$0xff]
    %v170 = vld [vmem:[#allocation5 + $0x2b0] sm:$0xff]
    %v171 = vld [vmem:[#allocation5 + $0x2b8] sm:$0xff]
    %v172 = vld [vmem:[#allocation5 + $0x2c0] sm:$0xff]
    %v173 = vld [vmem:[#allocation5 + $0x2c8] sm:$0xff]
    %v174 = vld [vmem:[#allocation5 + $0x2d0] sm:$0xff]
    %v175 = vld [vmem:[#allocation5 + $0x2d8] sm:$0xff]
    %v176 = vld [vmem:[#allocation5 + $0x2e0] sm:$0xff]
    %v177 = vld [vmem:[#allocation5 + $0x2e8] sm:$0xff]
    %v178 = vld [vmem:[#allocation5 + $0x2f0] sm:$0xff]
    %v179 = vld [vmem:[#allocation5 + $0x2f8] sm:$0xff]
    %v180 = vld [vmem:[#allocation5 + $0x300] sm:$0xff]
    %v181 = vld [vmem:[#allocation5 + $0x308] sm:$0xff]
    %v182 = vld [vmem:[#allocation5 + $0x310] sm:$0xff]
    %v183 = vld [vmem:[#allocation5 + $0x318] sm:$0xff]
    %v184 = vld [vmem:[#allocation5 + $0x320] sm:$0xff]
    %v185 = vld [vmem:[#allocation5 + $0x328] sm:$0xff]
    %v186 = vld [vmem:[#allocation5 + $0x330] sm:$0xff]
    %v187 = vld [vmem:[#allocation5 + $0x338] sm:$0xff]
    %v188 = vld [vmem:[#allocation5 + $0x340] sm:$0xff]
    %v189 = vld [vmem:[#allocation5 + $0x348] sm:$0xff]
    %v190 = vld [vmem:[#allocation5 + $0x350] sm:$0xff]
    %v191 = vld [vmem:[#allocation5 + $0x358] sm:$0xff]
    %v192 = vld [vmem:[#allocation5 + $0x360] sm:$0xff]
    %v193 = vld [vmem:[#allocation5 + $0x368] sm:$0xff]
    %v194 = vld [vmem:[#allocation5 + $0x370] sm:$0xff]
    %v195 = vld [vmem:[#allocation5 + $0x378] sm:$0xff]
    %v196 = vld [vmem:[#allocation5 + $0x380] sm:$0xff]
    %v197 = vld [vmem:[#allocation5 + $0x388] sm:$0xff]
    %v198 = vld [vmem:[#allocation5 + $0x390] sm:$0xff]
    %v199 = vld [vmem:[#allocation5 + $0x398] sm:$0xff]
    %v200 = vld [vmem:[#allocation5 + $0x3a0] sm:$0xff]
    %v201 = vld [vmem:[#allocation5 + $0x3a8] sm:$0xff]
    %v202 = vld [vmem:[#allocation5 + $0x3b0] sm:$0xff]
    %v203 = vld [vmem:[#allocation5 + $0x3b8] sm:$0xff]
    %v204 = vld [vmem:[#allocation5 + $0x3c0] sm:$0xff]
    %v205 = vld [vmem:[#allocation5 + $0x3c8] sm:$0xff]
    %v206 = vld [vmem:[#allocation5 + $0x3d0] sm:$0xff]
    %v207 = vld [vmem:[#allocation5 + $0x3d8] sm:$0xff]
    %v208 = vld [vmem:[#allocation5 + $0x3e0] sm:$0xff]
    %v209 = vld [vmem:[#allocation5 + $0x3e8] sm:$0xff]
    %v210 = vld [vmem:[#allocation5 + $0x3f0] sm:$0xff]
    %v211 = vld [vmem:[#allocation5 + $0x3f8] sm:$0xff]
    %212 = vmatpush.msra.mxu0 %v99
    %213 = vmatpush.msra.mxu0 %v98
    %214 = vmatpush.msra.mxu0 %v97
    %215 = vmatpush.msra.mxu0 %v96
    %216 = vmatpush.msra.mxu0 %v95
    %217 = vmatpush.msra.mxu0 %v94
    %218 = vmatpush.msra.mxu0 %v93
    %219 = vmatpush.msra.mxu0 %v92
    %220 = vmatpush.msra.mxu0 %v91
    %221 = vmatpush.msra.mxu0 %v90
    %222 = vmatpush.msra.mxu0 %v89
    %223 = vmatpush.msra.mxu0 %v88
    %224 = vmatpush.msra.mxu0 %v87
    %225 = vmatpush.msra.mxu0 %v86
    %226 = vmatpush.msra.mxu0 %v85
    %227 = vmatpush.msra.mxu0 %v84
    %228 = vmatmul.f32.gmra.mxu0 %v68
    %v229 = vpop.f32.mrf.mxu0
    %v230 = vadd.f32 0.0, %v229
    %231 = vmatmul.f32.gmra.mxu0 %v76
    %v232 = vpop.f32.mrf.mxu0
    %v233 = vadd.f32 0.0, %v232
    %234 = vdwg.mxu0
    %235 = vmatpush.msra.mxu0 %v115
    %236 = vmatpush.msra.mxu0 %v114
    %237 = vmatpush.msra.mxu0 %v113
    %238 = vmatpush.msra.mxu0 %v112
    %239 = vmatpush.msra.mxu0 %v111
    %240 = vmatpush.msra.mxu0 %v110
    %241 = vmatpush.msra.mxu0 %v109
    %242 = vmatpush.msra.mxu0 %v108
    %243 = vmatpush.msra.mxu0 %v107
    %244 = vmatpush.msra.mxu0 %v106
    %245 = vmatpush.msra.mxu0 %v105
    %246 = vmatpush.msra.mxu0 %v104
    %247 = vmatpush.msra.mxu0 %v103
    %248 = vmatpush.msra.mxu0 %v102
    %249 = vmatpush.msra.mxu0 %v101
    %250 = vmatpush.msra.mxu0 %v100
    %251 = vmatmul.f32.gmra.mxu0 %v69
    %v252 = vpop.f32.mrf.mxu0
    %v253 = vadd.f32 %v230, %v252
    %254 = vmatmul.f32.gmra.mxu0 %v77
    %v255 = vpop.f32.mrf.mxu0
    %v256 = vadd.f32 %v233, %v255
    %257 = vdwg.mxu0
    %258 = vmatpush.msra.mxu0 %v131
    %259 = vmatpush.msra.mxu0 %v130
    %260 = vmatpush.msra.mxu0 %v129
    %261 = vmatpush.msra.mxu0 %v128
    %262 = vmatpush.msra.mxu0 %v127
    %263 = vmatpush.msra.mxu0 %v126
    %264 = vmatpush.msra.mxu0 %v125
    %265 = vmatpush.msra.mxu0 %v124
    %266 = vmatpush.msra.mxu0 %v123
    %267 = vmatpush.msra.mxu0 %v122
    %268 = vmatpush.msra.mxu0 %v121
    %269 = vmatpush.msra.mxu0 %v120
    %270 = vmatpush.msra.mxu0 %v119
    %271 = vmatpush.msra.mxu0 %v118
    %272 = vmatpush.msra.mxu0 %v117
    %273 = vmatpush.msra.mxu0 %v116
    %274 = vmatmul.f32.gmra.mxu0 %v70
    %v275 = vpop.f32.mrf.mxu0
    %v276 = vadd.f32 %v253, %v275
    %277 = vmatmul.f32.gmra.mxu0 %v78
    %v278 = vpop.f32.mrf.mxu0
    %v279 = vadd.f32 %v256, %v278
    %280 = vdwg.mxu0
    %281 = vmatpush.msra.mxu0 %v147
    %282 = vmatpush.msra.mxu0 %v146
    %283 = vmatpush.msra.mxu0 %v145
    %284 = vmatpush.msra.mxu0 %v144
    %285 = vmatpush.msra.mxu0 %v143
    %286 = vmatpush.msra.mxu0 %v142
    %287 = vmatpush.msra.mxu0 %v141
    %288 = vmatpush.msra.mxu0 %v140
    %289 = vmatpush.msra.mxu0 %v139
    %290 = vmatpush.msra.mxu0 %v138
    %291 = vmatpush.msra.mxu0 %v137
    %292 = vmatpush.msra.mxu0 %v136
    %293 = vmatpush.msra.mxu0 %v135
    %294 = vmatpush.msra.mxu0 %v134
    %295 = vmatpush.msra.mxu0 %v133
    %296 = vmatpush.msra.mxu0 %v132
    %297 = vmatmul.f32.gmra.mxu0 %v71
    %v298 = vpop.f32.mrf.mxu0
    %v299 = vadd.f32 %v276, %v298
    %300 = vmatmul.f32.gmra.mxu0 %v79
    %v301 = vpop.f32.mrf.mxu0
    %v302 = vadd.f32 %v279, %v301
    %303 = vdwg.mxu0
    %304 = vmatpush.msra.mxu0 %v163
    %305 = vmatpush.msra.mxu0 %v162
    %306 = vmatpush.msra.mxu0 %v161
    %307 = vmatpush.msra.mxu0 %v160
    %308 = vmatpush.msra.mxu0 %v159
    %309 = vmatpush.msra.mxu0 %v158
    %310 = vmatpush.msra.mxu0 %v157
    %311 = vmatpush.msra.mxu0 %v156
    %312 = vmatpush.msra.mxu0 %v155
    %313 = vmatpush.msra.mxu0 %v154
    %314 = vmatpush.msra.mxu0 %v153
    %315 = vmatpush.msra.mxu0 %v152
    %316 = vmatpush.msra.mxu0 %v151
    %317 = vmatpush.msra.mxu0 %v150
    %318 = vmatpush.msra.mxu0 %v149
    %319 = vmatpush.msra.mxu0 %v148
    %320 = vmatmul.f32.gmra.mxu0 %v72
    %v321 = vpop.f32.mrf.mxu0
    %v322 = vadd.f32 %v299, %v321
    %323 = vmatmul.f32.gmra.mxu0 %v80
    %v324 = vpop.f32.mrf.mxu0
    %v325 = vadd.f32 %v302, %v324
    %326 = vdwg.mxu0
    %327 = vmatpush.msra.mxu0 %v179
    %328 = vmatpush.msra.mxu0 %v178
    %329 = vmatpush.msra.mxu0 %v177
    %330 = vmatpush.msra.mxu0 %v176
    %331 = vmatpush.msra.mxu0 %v175
    %332 = vmatpush.msra.mxu0 %v174
    %333 = vmatpush.msra.mxu0 %v173
    %334 = vmatpush.msra.mxu0 %v172
    %335 = vmatpush.msra.mxu0 %v171
    %336 = vmatpush.msra.mxu0 %v170
    %337 = vmatpush.msra.mxu0 %v169
    %338 = vmatpush.msra.mxu0 %v168
    %339 = vmatpush.msra.mxu0 %v167
    %340 = vmatpush.msra.mxu0 %v166
    %341 = vmatpush.msra.mxu0 %v165
    %342 = vmatpush.msra.mxu0 %v164
    %343 = vmatmul.f32.gmra.mxu0 %v73
    %v344 = vpop.f32.mrf.mxu0
    %v345 = vadd.f32 %v322, %v344
    %346 = vmatmul.f32.gmra.mxu0 %v81
    %v347 = vpop.f32.mrf.mxu0
    %v348 = vadd.f32 %v325, %v347
    %349 = vdwg.mxu0
    %350 = vmatpush.msra.mxu0 %v195
    %351 = vmatpush.msra.mxu0 %v194
    %352 = vmatpush.msra.mxu0 %v193
    %353 = vmatpush.msra.mxu0 %v192
    %354 = vmatpush.msra.mxu0 %v191
    %355 = vmatpush.msra.mxu0 %v190
    %356 = vmatpush.msra.mxu0 %v189
    %357 = vmatpush.msra.mxu0 %v188
    %358 = vmatpush.msra.mxu0 %v187
    %359 = vmatpush.msra.mxu0 %v186
    %360 = vmatpush.msra.mxu0 %v185
    %361 = vmatpush.msra.mxu0 %v184
    %362 = vmatpush.msra.mxu0 %v183
    %363 = vmatpush.msra.mxu0 %v182
    %364 = vmatpush.msra.mxu0 %v181
    %365 = vmatpush.msra.mxu0 %v180
    %366 = vmatmul.f32.gmra.mxu0 %v74
    %v367 = vpop.f32.mrf.mxu0
    %v368 = vadd.f32 %v345, %v367
    %369 = vmatmul.f32.gmra.mxu0 %v82
    %v370 = vpop.f32.mrf.mxu0
    %v371 = vadd.f32 %v348, %v370
    %372 = vdwg.mxu0
    %373 = vmatpush.msra.mxu0 %v211
    %374 = vmatpush.msra.mxu0 %v210
    %375 = vmatpush.msra.mxu0 %v209
    %376 = vmatpush.msra.mxu0 %v208
    %377 = vmatpush.msra.mxu0 %v207
    %378 = vmatpush.msra.mxu0 %v206
    %379 = vmatpush.msra.mxu0 %v205
    %380 = vmatpush.msra.mxu0 %v204
    %381 = vmatpush.msra.mxu0 %v203
    %382 = vmatpush.msra.mxu0 %v202
    %383 = vmatpush.msra.mxu0 %v201
    %384 = vmatpush.msra.mxu0 %v200
    %385 = vmatpush.msra.mxu0 %v199
    %386 = vmatpush.msra.mxu0 %v198
    %387 = vmatpush.msra.mxu0 %v197
    %388 = vmatpush.msra.mxu0 %v196
    %389 = vmatmul.f32.gmra.mxu0 %v75
    %v390 = vpop.f32.mrf.mxu0
    %v391 = vadd.f32 %v368, %v390
    %392 = vmatmul.f32.gmra.mxu0 %v83
    %v393 = vpop.f32.mrf.mxu0
    %v394 = vadd.f32 %v371, %v393
    %395 = vdwg.mxu0
    %v396 = vld [vmem:[%s2] sm:$0x1]
    %v398 = vperm.slane %v396, 0
    %vm400 = vcmp.gt.f32.partialorder %v391, %v398
    %vm401 = vcmp.gt.f32.partialorder %v394, %v398
    %v402 = vsel %vm400, 1, 0
    %v403 = vsel %vm401, 1, 0
    %v404 = vcvt.s32.f32 %v402
    %v405 = vcvt.s32.f32 %v403
    %v406 = vld [vmem:[#allocation7] sm:$0xff]
    %v407 = vld [vmem:[#allocation7 + $0x8] sm:$0xff]
    %v408 = vld [vmem:[#allocation7 + $0x10] sm:$0xff]
    %v409 = vld [vmem:[#allocation7 + $0x18] sm:$0xff]
    %v410 = vld [vmem:[#allocation7 + $0x20] sm:$0xff]
    %v411 = vld [vmem:[#allocation7 + $0x28] sm:$0xff]
    %v412 = vld [vmem:[#allocation7 + $0x30] sm:$0xff]
    %v413 = vld [vmem:[#allocation7 + $0x38] sm:$0xff]
    %v414 = vld [vmem:[#allocation7 + $0x40] sm:$0xff]
    %v415 = vld [vmem:[#allocation7 + $0x48] sm:$0xff]
    %v416 = vld [vmem:[#allocation7 + $0x50] sm:$0xff]
    %v417 = vld [vmem:[#allocation7 + $0x58] sm:$0xff]
    %v418 = vld [vmem:[#allocation7 + $0x60] sm:$0xff]
    %v419 = vld [vmem:[#allocation7 + $0x68] sm:$0xff]
    %v420 = vld [vmem:[#allocation7 + $0x70] sm:$0xff]
    %v421 = vld [vmem:[#allocation7 + $0x78] sm:$0xff]
    %422 = vmatpush.msra.mxu0 %v421
    %423 = vmatpush.msra.mxu0 %v420
    %424 = vmatpush.msra.mxu0 %v419
    %425 = vmatpush.msra.mxu0 %v418
    %426 = vmatpush.msra.mxu0 %v417
    %427 = vmatpush.msra.mxu0 %v416
    %428 = vmatpush.msra.mxu0 %v415
    %429 = vmatpush.msra.mxu0 %v414
    %430 = vmatpush.msra.mxu0 %v413
    %431 = vmatpush.msra.mxu0 %v412
    %432 = vmatpush.msra.mxu0 %v411
    %433 = vmatpush.msra.mxu0 %v410
    %434 = vmatpush.msra.mxu0 %v409
    %435 = vmatpush.msra.mxu0 %v408
    %436 = vmatpush.msra.mxu0 %v407
    %437 = vmatpush.msra.mxu0 %v406
    %438 = vmatmul.f32.gmra.mxu0 %v404
    %v439 = vpop.f32.mrf.mxu0
    %v440 = vadd.f32 0.0, %v439
    %441 = vmatmul.f32.gmra.mxu0 %v405
    %v442 = vpop.f32.mrf.mxu0
    %v443 = vadd.f32 0.0, %v442
    %444 = vdwg.mxu0
    %v445 = vld [vmem:[%s4] sm:$0x1]
    %v447 = vperm.slane %v445, 0
    %vm449 = vcmp.eq.f32.partialorder %v440, %v447
    %vm450 = vcmp.eq.f32.partialorder %v443, %v447
    %v451 = vsel %vm449, 1, 0
    %v452 = vsel %vm450, 1, 0
    %v453 = vcvt.s32.f32 %v451
    %v454 = vcvt.s32.f32 %v452
    %455 = vst [vmem:[#allocation8] sm:$0xff] %v453
    %456 = vst [vmem:[#allocation8 + $0x8] sm:$0xff] %v454
    // Predicated region
    $region34: #{tpu_custom_call.1} parent=1 // pred_check
      _
    $region35: #{tpu_custom_call.1} parent=1 // pred_check_branch
      %458 = sbr.rel (0) target = $region37
    $region36: #{tpu_custom_call.1} parent=1 // pred_region
      %460 = vsyncadd [#allocation4], 0
      %s461 = sshll.u32 [#allocation8], 4
      %s462 = int_to_ptr.vmem [resolvable:$true] %s461
      %s463 = sshll.u32 %s5, 4
      %s464 = int_to_ptr.hbm [resolvable:$true] %s463
      %469 = dma.vmem_to_hbm [thread:$0]  %s462, 256, %s464, [#allocation4], 128, 128, 8
    $region37: #{tpu_custom_call.1} parent=1 // pred_fallthru
      _
    // Predicated region
    $region38: #{tpu_custom_call.1} parent=1 // pred_check
      _
    $region39: #{tpu_custom_call.1} parent=1 // pred_check_branch
      %471 = sbr.rel (0) target = $region41
    $region40: #{tpu_custom_call.1} parent=1 // pred_region
      %473 = dma.done [#allocation4], 256
    $region41: #{tpu_custom_call.1} parent=1 // pred_fallthru
      _
    %474 = vsyncpa [#allocation3], 1
    %475 = vsyncpa [#allocation6], 1
    %476 = vsyncpa [#allocation4], 1

</llo_original>
